<compile_context>
chip_gen: v7x
topology: tpu7x:2x2x1
jax: 0.10.0
libtpu: 0.0.40
codegen_flags: <defaults>
</compile_context>

<pallas_src>
import functools
import math

import jax
import jax.numpy as jnp
from jax.experimental import pallas as pl
from jax.experimental.pallas import tpu as pltpu

_F32 = jnp.float32


# ---------------------------------------------------------------------------
# Tiling / compiler-params helpers
# ---------------------------------------------------------------------------
def _choose_row_tile(n, row_bytes, budget=12 << 20):
    """Largest row block (multiple of 8, dividing n) whose double-buffered
    tiles stay under `budget` bytes. Falls back to the full extent when n is
    not sublane-aligned (block == full dim is always legal)."""
    if n % 8 != 0:
        return n
    for tm in (2048, 1024, 512, 256, 128, 64, 32, 16, 8):
        if tm <= n and n % tm == 0 and 2 * tm * row_bytes <= budget:
            return tm
    return 8


def _mosaic_params(resident_bytes):
    """Parallel row grid + explicit scoped-VMEM limit with headroom.

    Capped at 48 MiB so the same limit is legal on v5e/v6e (128 MiB physical)
    and v7x (64 MiB physical); the 32 MiB floor is >= every default."""
    vmem = int(min(max(32 << 20, 4 * resident_bytes), 48 << 20))
    return pltpu.CompilerParams(
        dimension_semantics=("parallel",),
        vmem_limit_bytes=vmem,
    )


# ---------------------------------------------------------------------------
# Kernels
# ---------------------------------------------------------------------------
def _degree_rsqrt_kernel(adj_ref, d_ref, *, add_identity):
    """d = rsqrt(rowsum(adj) [+ 1]) for one row block of adj."""
    adj = adj_ref[...].astype(_F32)
    deg = jnp.sum(adj, axis=1, keepdims=True)      # XLU reduce over full row
    if add_identity:
        deg = deg + 1.0                            # identity folded analytically
    deg = jnp.maximum(deg, 1e-12)                  # guard isolated nodes (deg == 0)
    d_ref[...] = jax.lax.rsqrt(deg)


def _scaled_support_kernel(x_ref, w_ref, d_ref, s_ref):
    """S' = d * (X @ W) for one row block (projection-first path)."""
    support = jnp.dot(x_ref[...].astype(_F32), w_ref[...].astype(_F32),
                      preferred_element_type=_F32)
    s_ref[...] = d_ref[...] * support


def _aggregate_kernel(adj_ref, s_full_ref, s_tile_ref, d_ref, b_ref, out_ref, *,
                      add_identity):
    """out = relu(d * (A_rows @ S' [+ S'_rows]) + b) for one row block."""
    agg = jnp.dot(adj_ref[...].astype(_F32), s_full_ref[...],
                  preferred_element_type=_F32)
    if add_identity:
        agg = agg + s_tile_ref[...]
    out = d_ref[...] * agg + b_ref[...]
    out_ref[...] = jnp.maximum(out, 0.0).astype(out_ref.dtype)


def _row_scale_kernel(x_ref, d_ref, out_ref):
    """X' = d * X for one row block (aggregation-first path)."""
    out_ref[...] = (d_ref[...] * x_ref[...].astype(_F32)).astype(out_ref.dtype)


def _aggregate_project_kernel(adj_ref, xs_full_ref, xs_tile_ref, d_ref, w_ref,
                              b_ref, out_ref, *, add_identity):
    """out = relu((d * (A_rows @ X' [+ X'_rows])) @ W + b) for one row block."""
    agg = jnp.dot(adj_ref[...].astype(_F32), xs_full_ref[...],
                  preferred_element_type=_F32)
    if add_identity:
        agg = agg + xs_tile_ref[...]
    agg = d_ref[...] * agg
    out = jnp.dot(agg, w_ref[...].astype(_F32), preferred_element_type=_F32)
    out = out + b_ref[...]
    out_ref[...] = jnp.maximum(out, 0.0).astype(out_ref.dtype)


# ---------------------------------------------------------------------------
# Wrappers
# ---------------------------------------------------------------------------
def degree_rsqrt(adj, *, add_identity=True):
    """rsqrt of node degrees, computed once for the whole layer stack."""
    n = adj.shape[0]
    tm = _choose_row_tile(n, n * 4)
    return pl.pallas_call(
        functools.partial(_degree_rsqrt_kernel, add_identity=add_identity),
        out_shape=jax.ShapeDtypeStruct((n, 1), _F32),
        grid_spec=pltpu.PrefetchScalarGridSpec(
            num_scalar_prefetch=0,
            grid=(n // tm,),
            in_specs=[pl.BlockSpec((tm, n), lambda i: (i, 0))],
            out_specs=pl.BlockSpec((tm, 1), lambda i: (i, 0)),
        ),
        compiler_params=_mosaic_params(tm * n * 4),
    )(adj)


def gcn_layer(x, w, b, adj, d_inv_sqrt, *, add_identity=True):
    """One GraphConvolutionLayer + ReLU (dropout is identity in eval mode)."""
    n, d_in = x.shape
    d_out = w.shape[1]
    b2d = b.reshape(1, d_out).astype(_F32)
    params_bytes = (d_in * d_out + d_out) * 4

    if d_out <= d_in:
        # -------- projection first: S' = d * (X @ W), then aggregation --------
        tm = _choose_row_tile(n, (d_in + d_out + 1) * 4)
        s_prime = pl.pallas_call(
            _scaled_support_kernel,
            out_shape=jax.ShapeDtypeStruct((n, d_out), _F32),
            grid_spec=pltpu.PrefetchScalarGridSpec(
                num_scalar_prefetch=0,
                grid=(n // tm,),
                in_specs=[
                    pl.BlockSpec((tm, d_in), lambda i: (i, 0)),     # X row tile
                    pl.BlockSpec((d_in, d_out), lambda i: (0, 0)),  # W (resident)
                    pl.BlockSpec((tm, 1), lambda i: (i, 0)),        # d row tile
                ],
                out_specs=pl.BlockSpec((tm, d_out), lambda i: (i, 0)),
            ),
            compiler_params=_mosaic_params(tm * (d_in + d_out) * 4 + params_bytes),
            cost_estimate=pl.CostEstimate(
                flops=2 * n * d_in * d_out,
                transcendentals=0,
                bytes_accessed=(n * d_in + d_in * d_out + 2 * n * d_out) * 4,
            ),
        )(x, w, d_inv_sqrt)

        tm = _choose_row_tile(n, (n + 2 * d_out + 1) * 4)
        return pl.pallas_call(
            functools.partial(_aggregate_kernel, add_identity=add_identity),
            out_shape=jax.ShapeDtypeStruct((n, d_out), _F32),
            grid_spec=pltpu.PrefetchScalarGridSpec(
                num_scalar_prefetch=0,
                grid=(n // tm,),
                in_specs=[
                    pl.BlockSpec((tm, n), lambda i: (i, 0)),       # adj row tile
                    pl.BlockSpec((n, d_out), lambda i: (0, 0)),    # S' (resident)
                    pl.BlockSpec((tm, d_out), lambda i: (i, 0)),   # S' row tile (identity)
                    pl.BlockSpec((tm, 1), lambda i: (i, 0)),       # d row tile
                    pl.BlockSpec((1, d_out), lambda i: (0, 0)),    # bias
                ],
                out_specs=pl.BlockSpec((tm, d_out), lambda i: (i, 0)),
            ),
            compiler_params=_mosaic_params(
                tm * n * 4 + n * d_out * 4 + 2 * tm * d_out * 4),
            cost_estimate=pl.CostEstimate(
                flops=2 * n * n * d_out,
                transcendentals=0,
                bytes_accessed=(n * n + 2 * n * d_out) * 4,
            ),
        )(adj, s_prime, s_prime, d_inv_sqrt, b2d)

    # -------- aggregation first (expanding layer, d_out > d_in) --------
    tm = _choose_row_tile(n, (2 * d_in + 1) * 4)
    x_scaled = pl.pallas_call(
        _row_scale_kernel,
        out_shape=jax.ShapeDtypeStruct((n, d_in), _F32),
        grid_spec=pltpu.PrefetchScalarGridSpec(
            num_scalar_prefetch=0,
            grid=(n // tm,),
            in_specs=[
                pl.BlockSpec((tm, d_in), lambda i: (i, 0)),
                pl.BlockSpec((tm, 1), lambda i: (i, 0)),
            ],
            out_specs=pl.BlockSpec((tm, d_in), lambda i: (i, 0)),
        ),
        compiler_params=_mosaic_params(2 * tm * d_in * 4),
    )(x, d_inv_sqrt)

    tm = _choose_row_tile(n, (n + d_in + d_out + 1) * 4)
    return pl.pallas_call(
        functools.partial(_aggregate_project_kernel, add_identity=add_identity),
        out_shape=jax.ShapeDtypeStruct((n, d_out), _F32),
        grid_spec=pltpu.PrefetchScalarGridSpec(
            num_scalar_prefetch=0,
            grid=(n // tm,),
            in_specs=[
                pl.BlockSpec((tm, n), lambda i: (i, 0)),         # adj row tile
                pl.BlockSpec((n, d_in), lambda i: (0, 0)),       # X' (resident)
                pl.BlockSpec((tm, d_in), lambda i: (i, 0)),      # X' row tile (identity)
                pl.BlockSpec((tm, 1), lambda i: (i, 0)),         # d row tile
                pl.BlockSpec((d_in, d_out), lambda i: (0, 0)),   # W (resident)
                pl.BlockSpec((1, d_out), lambda i: (0, 0)),      # bias
            ],
            out_specs=pl.BlockSpec((tm, d_out), lambda i: (i, 0)),
        ),
        compiler_params=_mosaic_params(
            tm * n * 4 + n * d_in * 4 + tm * (d_in + d_out) * 4 + params_bytes),
        cost_estimate=pl.CostEstimate(
            flops=2 * n * n * d_in + 2 * n * d_in * d_out,
            transcendentals=0,
            bytes_accessed=(n * n + n * d_in + d_in * d_out + n * d_out) * 4,
        ),
    )(adj, x_scaled, x_scaled, d_inv_sqrt, w, b2d)


def multi_layer_gcn(x, adj, params, *, add_identity=True):
    """params: list of (W, b). Applies relu(dropout(gcn(x, adj))) per layer."""
    # TODO(synk): training-mode dropout (random mask) is not applied (eval-mode identity).
    # TODO(synk): fuse the full layer stack into one pallas_call keeping features
    #             resident in VMEM between layers (needs stacked/padded weights).
    d_inv_sqrt = degree_rsqrt(adj, add_identity=add_identity)  # hoisted, layer-invariant
    for w, b in params:
        x = gcn_layer(x, w, b, adj, d_inv_sqrt, add_identity=add_identity)
    return x


# ---------------------------------------------------------------------------
# Init + pure-JAX reference (for correctness checking)
# ---------------------------------------------------------------------------
def init_params(key, dims):
    """Deterministic init matching GraphConvolutionLayer.reset_parameters."""
    params = []
    for in_dim, out_dim in zip(dims[:-1], dims[1:]):
        key, kw, kb = jax.random.split(key, 3)
        stdv = 1.0 / math.sqrt(out_dim)
        w = jax.random.uniform(kw, (in_dim, out_dim), _F32, -stdv, stdv)
        b = jax.random.uniform(kb, (out_dim,), _F32, -stdv, stdv)
        params.append((w, b))
    return params


def _gcn_layer_ref(x, w, b, adj, add_identity):
    n = x.shape[0]
    a = adj + jnp.eye(n, dtype=adj.dtype) if add_identity else adj
    d = 1.0 / jnp.sqrt(jnp.sum(a, axis=1))
    a_norm = a * d[:, None] * d[None, :]
    hi = jax.lax.Precision.HIGHEST
    out = jnp.dot(a_norm, jnp.dot(x, w, precision=hi), precision=hi) + b
    return jnp.maximum(out, 0.0)


def multi_layer_gcn_ref(x, adj, params, *, add_identity=True):
    for w, b in params:
        x = _gcn_layer_ref(x, w, b, adj, add_identity)
    return x


if __name__ == "__main__":
    key = jax.random.PRNGKey(0)
    k_x, k_adj, k_p1, k_p2 = jax.random.split(key, 4)

    N = 8                  # number of nodes
    dims = [32, 16, 8]     # contracting stack -> projection-first path

    x = jax.random.normal(k_x, (N, dims[0]), _F32)
    a = (jax.random.uniform(k_adj, (N, N)) > 0.5).astype(_F32)
    adj = jnp.maximum(a, a.T)          # symmetric 0/1 adjacency

    params = init_params(k_p1, dims)
    out = multi_layer_gcn(x, adj, params, add_identity=True)
    jax.block_until_ready(out)
    assert out.shape == (N, dims[-1]), out.shape

    ref = multi_layer_gcn_ref(x, adj, params, add_identity=True)
    err = float(jnp.max(jnp.abs(out - ref)))
    assert err < 3e-2, f"contracting-stack mismatch vs reference: {err}"

    # Expanding layer (d_out > d_in) exercises the aggregation-first path.
    params_up = init_params(k_p2, [dims[-1], 32])
    out_up = multi_layer_gcn(out, adj, params_up, add_identity=True)
    jax.block_until_ready(out_up)
    ref_up = multi_layer_gcn_ref(out, adj, params_up, add_identity=True)
    err_up = float(jnp.max(jnp.abs(out_up - ref_up)))
    assert err_up < 3e-2, f"expanding-layer mismatch vs reference: {err_up}"

    print("KERNEL_OK")
</pallas_src>

<mosaic_0001>
module attributes {stable_mosaic.version = 11 : i64} {
  func.func @_degree_rsqrt_kernel(%arg0: i32, %arg1: memref<8x8xf32, #tpu.memory_space<vmem>>, %arg2: memref<8x1xf32, #tpu.memory_space<vmem>>) attributes {dimension_semantics = [#tpu.dimension_semantics<parallel>], iteration_bounds = array<i64: 1>, scalar_prefetch = 0 : i64, scratch_operands = 0 : i64, tpu.core_type = #tpu.core_type<tc>, window_params = [{transform_indices = @transform_0, window_bounds = array<i64: 8, 8>}, {transform_indices = @transform_1, window_bounds = array<i64: 8, 1>}]} {
    %c0 = arith.constant 0 : index
    %c0_0 = arith.constant 0 : index
    %0 = vector.load %arg1[%c0, %c0_0] : memref<8x8xf32, #tpu.memory_space<vmem>>, vector<8x8xf32>
    %cst = arith.constant dense<0.000000e+00> : vector<8xf32>
    %1 = vector.multi_reduction <add>, %0, %cst [1] : vector<8x8xf32> to vector<8xf32>
    %2 = vector.shape_cast %1 : vector<8xf32> to vector<8x1xf32>
    %cst_1 = arith.constant 1.000000e+00 : f32
    %3 = vector.broadcast %cst_1 : f32 to vector<8x1xf32>
    %4 = arith.addf %2, %3 : vector<8x1xf32>
    %cst_2 = arith.constant 9.99999996E-13 : f32
    %5 = vector.broadcast %cst_2 : f32 to vector<8x1xf32>
    %6 = arith.maximumf %4, %5 : vector<8x1xf32>
    %7 = math.rsqrt %6 : vector<8x1xf32>
    %c0_3 = arith.constant 0 : index
    %c0_4 = arith.constant 0 : index
    %8 = vector.load %arg2[%c0_3, %c0_4] : memref<8x1xf32, #tpu.memory_space<vmem>>, vector<8x1xf32>
    tpu.vector_store %arg2[%c0_3, %c0_4], %7 {strides = array<i32>} : memref<8x1xf32, #tpu.memory_space<vmem>>, vector<8x1xf32>,
    return
  }
  func.func @transform_0(%arg0: i32) -> (i32, i32) {
    %c0_i32 = arith.constant 0 : i32
    %c0_i32_0 = arith.constant 0 : i32
    return %arg0, %c0_i32 : i32, i32
  }
  func.func @transform_1(%arg0: i32) -> (i32, i32) {
    %c0_i32 = arith.constant 0 : i32
    %c0_i32_0 = arith.constant 0 : i32
    return %arg0, %c0_i32 : i32, i32
  }
}

</mosaic_0001>

<llo_original>
// kernel: tpu_custom_call.1
$region0: #{tpu_custom_call.1}
  #allocation0 [shape = 'u32[]', space=smem, size = 0x4, offset = 0x4, fixed_abs, tag = 'smem constant byte address 0x4 - core index']
  #allocation1 [shape = 'u32[144,128]{1,0:T(1,128)}', space=vmem, size = 0x12000, scoped, tag = 'internal scratch']
  %s0 = inlined_call_operand.hbm [shape: f32[8,8], index: 0, kind: input, shape index: {}]
  %s1 = inlined_call_operand.vmem [shape: f32[8,1], index: 1, kind: output, shape index: {}]
  %s2 = sld [smem:[#allocation0]]
  $region18: #{tpu_custom_call.1} parent=0
    _
  %s4 = ssub.s32 1, %s2
  %s5 = scalar_select 0, %s4, %s2
  $region1: #{tpu_custom_call.1} parent=0
    #allocation2 [shape = 'u8[4096]{0}', space=vmem, size = 0x1000, scoped, tag = 'input window, operand 0, single buffered']
    #allocation3 [shape = 's32[1]{0}', space=sflag, size = 0x4, scoped, tag = 'scoped memory for tpu_custom_call.1']
    %6 = vsyncpa [#allocation3], 0
    // Predicated region
    $region2: #{tpu_custom_call.1} parent=1 // pred_check
      _
    $region3: #{tpu_custom_call.1} parent=1 // pred_check_branch
      %8 = sbr.rel (0) target = $region5
    $region4: #{tpu_custom_call.1} parent=1 // pred_region
      %s10 = ssub.s32 128, 128
      %11 = vsyncadd [#allocation3], %s10
      %s13 = sshll.u32 [#allocation2], 4
      %s14 = int_to_ptr.vmem [resolvable:$true] %s13
      %16 = dma.hbm_to_vmem [thread:$0]  %s0, 128, %s14, [#allocation3]
    $region5: #{tpu_custom_call.1} parent=1 // pred_fallthru
      _
    // Predicated region
    $region6: #{tpu_custom_call.1} parent=1 // pred_check
      _
    $region7: #{tpu_custom_call.1} parent=1 // pred_check_branch
      %18 = sbr.rel (0) target = $region9
    $region8: #{tpu_custom_call.1} parent=1 // pred_region
      %19 = dma.done [#allocation3], 128
    $region9: #{tpu_custom_call.1} parent=1 // pred_fallthru
      _
    %v20 = vld [vmem:[#allocation2] sm:$0xff]
    %vm21 = vcmask 64512
    %v22 = vsel %vm21, %v20, 0.0
    %23 = vadd.xlane.f32.xlu0 %v22
    %v24 = vpop.xlane.xlu0 %23
    %v25 = vadd.f32 %v24, 1.0
    %v26 = vmax.f32 %v25, 1e-12
    %v27 = vrsqrt.pop %v26
    %vm28 = vcmask 7168
    %29 = vst.msk [vmem:[%s1] sm:$0xff] %vm28, %v27
    // Predicated region
    $region10: #{tpu_custom_call.1} parent=1 // pred_check
      _
    $region11: #{tpu_custom_call.1} parent=1 // pred_check_branch
      %31 = sbr.rel (0) target = $region13
    $region12: #{tpu_custom_call.1} parent=1 // pred_region
      _
    $region13: #{tpu_custom_call.1} parent=1 // pred_fallthru
      _
    // Predicated region
    $region14: #{tpu_custom_call.1} parent=1 // pred_check
      _
    $region15: #{tpu_custom_call.1} parent=1 // pred_check_branch
      %33 = sbr.rel (0) target = $region17
    $region16: #{tpu_custom_call.1} parent=1 // pred_region
      _
    $region17: #{tpu_custom_call.1} parent=1 // pred_fallthru
      _
    %34 = vsyncpa [#allocation3], 1

</llo_original>
